<compile_context>
chip_gen: v7x
topology: tpu7x:2x2x1
jax: 0.10.0
libtpu: 0.0.40
codegen_flags: <defaults>
</compile_context>

<pallas_src>
import functools

import jax
import jax.numpy as jnp
import numpy as np
from jax import lax
from jax.experimental import pallas as pl
from jax.experimental.pallas import tpu as pltpu

COORD = 5.0      # self.coord
NOOBJ = 0.5      # self.noobj

LANES = 128      # vreg lane width
SLAB = 8         # sublane rows per inner slab -> one f32 vreg per feature plane
TRB_MAX = 256    # max sublane rows per grid block (v7x 64 MiB VMEM safe)
NUM_CORES = 2    # leading "parallel" grid axis (v7x megacore; harmless on 1 TC)


def _tree_sum(terms):
    """Pairwise tree reduction (shorter dependent VPU add chain)."""
    terms = list(terms)
    while len(terms) > 1:
        nxt = [a + b for a, b in zip(terms[::2], terms[1::2])]
        if len(terms) % 2:
            nxt.append(terms[-1])
        terms = nxt
    return terms[0]


def _yolo_loss_kernel(pred_ref, tgt_ref, out_ref, *, S, B, C, n_slabs):
    # pred_ref / tgt_ref: (D, TRB, LANES) f32 feature-major blocks
    # out_ref:            (SLAB, LANES)   f32 per-core partial-sum accumulator
    i = pl.program_id(1)
    inv_s = jnp.float32(1.0 / S)

    @pl.when(i == 0)
    def _():
        out_ref[...] = jnp.zeros_like(out_ref)

    def slab_body(s, acc):
        r0 = pl.multiple_of(s * SLAB, SLAB)

        def p(c):
            return pred_ref[c, pl.ds(r0, SLAB), :]      # (SLAB, LANES) plane

        def t(c):
            return tgt_ref[c, pl.ds(r0, SLAB), :]

        # object mask: target confidence of box 0 (> 0).  Zero-padded cells are
        # "no-object" and contribute exactly 0 everywhere.
        obj = t(C) > 0.0

        # ---- class squared error (tree-summed over classes) ------------------
        csq = _tree_sum([(p(c) - t(c)) ** 2 for c in range(C)])

        # ---- target box 0 -> xyxy (used for IoU-based responsibility) --------
        tx = t(C + 1)
        ty = t(C + 2)
        tw = t(C + 3)
        th = t(C + 4)
        tx1 = tx * inv_s - 0.5 * tw
        tx2 = tx * inv_s + 0.5 * tw
        ty1 = ty * inv_s - 0.5 * th
        ty2 = ty * inv_s + 0.5 * th
        t_area = (tx2 - tx1) * (ty2 - ty1)

        noobj_terms = []
        best_iou = None
        rp = rt = None

        for b in range(B):            # B is small & static -> unrolled
            off = C + 5 * b
            pc = p(off)
            tc = t(off)

            # no-object confidence squared error for this box slot
            dconf = pc - tc
            noobj_terms.append(dconf * dconf)

            # predicted box b -> xyxy
            px = p(off + 1)
            py = p(off + 2)
            pw = p(off + 3)
            ph = p(off + 4)
            px1 = px * inv_s - 0.5 * pw
            px2 = px * inv_s + 0.5 * pw
            py1 = py * inv_s - 0.5 * ph
            py2 = py * inv_s + 0.5 * ph

            iw = jnp.maximum(jnp.minimum(px2, tx2) - jnp.maximum(px1, tx1), 0.0)
            ih = jnp.maximum(jnp.minimum(py2, ty2) - jnp.maximum(py1, ty1), 0.0)
            inter = iw * ih
            p_area = (px2 - px1) * (py2 - py1)
            denom = p_area + t_area - inter
            # NaN-safe IoU: 0/0 on padded / zero-area boxes becomes 0, not NaN.
            iou_b = inter / jnp.where(denom > 0.0, denom, 1.0)

            if b == 0:
                best_iou = iou_b
                rp = (pc, px, py, pw, ph)
                # target box in the same (responsible) slot — reuse box-0 slices
                rt = (tc, tx, ty, tw, th)
            else:
                tb = (tc, t(off + 1), t(off + 2), t(off + 3), t(off + 4))
                better = iou_b > best_iou     # strict > keeps first index on ties
                best_iou = jnp.where(better, iou_b, best_iou)
                rp = tuple(jnp.where(better, new, old)
                           for new, old in zip((pc, px, py, pw, ph), rp))
                rt = tuple(jnp.where(better, new, old)
                           for new, old in zip(tb, rt))

        rp_c, rp_x, rp_y, rp_w, rp_h = rp
        rt_c, rt_x, rt_y, rt_w, rt_h = rt

        xy_sq = (rp_x - rt_x) ** 2 + (rp_y - rt_y) ** 2
        wh_sq = ((jnp.sqrt(rp_w) - jnp.sqrt(rt_w)) ** 2
                 + (jnp.sqrt(rp_h) - jnp.sqrt(rt_h)) ** 2)
        co_sq = (rp_c - rt_c) ** 2
        noobj_sq = _tree_sum(noobj_terms)

        # One fused select per cell: object cells take coord+conf+class terms,
        # no-object cells take the weighted confidence terms.  Select-based
        # masking keeps any sqrt/IoU NaN on the unselected branch out of the loss.
        obj_terms = COORD * (xy_sq + wh_sq) + co_sq + csq
        cell_loss = jnp.where(obj, obj_terms, NOOBJ * noobj_sq)
        return acc + cell_loss

    acc = lax.fori_loop(0, n_slabs, slab_body,
                        jnp.zeros((SLAB, LANES), jnp.float32))
    out_ref[...] = out_ref[...] + acc


def yolo_loss(prediction_matrix, target_matrix, *, S, B, C):
    """prediction_matrix: (N, S*S*(C+5B)); target_matrix: (N, S, S, C+5B)."""
    N = prediction_matrix.shape[0]
    D = C + 5 * B
    M = N * S * S
    pred_cells = prediction_matrix.reshape(M, D).astype(jnp.float32)
    tgt_cells = target_matrix.reshape(M, D).astype(jnp.float32)

    # ---- adaptive block sizing (pads <~4% of M, caps VMEM for v7x) -----------
    m_rows = max(int(pl.cdiv(M, LANES)), 1)                  # 128-cell rows
    steps = max(int(pl.cdiv(m_rows, TRB_MAX * NUM_CORES)), 1)
    trb = int(pl.cdiv(m_rows, steps * NUM_CORES))
    trb = max(((trb + SLAB - 1) // SLAB) * SLAB, SLAB)       # multiple of 8
    rows_pad = steps * NUM_CORES * trb
    m_pad = rows_pad * LANES
    n_slabs = trb // SLAB

    # Zero-pad + transpose + reshape into the feature-major, lane-dense layout
    # (D, rows, 128); under jit this is a single fusible XLA pass per tensor.
    def to_feature_major(x):
        x = jnp.pad(x, ((0, m_pad - M), (0, 0)))
        return x.T.reshape(D, rows_pad, LANES)

    pred_fm = to_feature_major(pred_cells)
    tgt_fm = to_feature_major(tgt_cells)

    kernel = functools.partial(_yolo_loss_kernel, S=S, B=B, C=C, n_slabs=n_slabs)

    block_bytes = D * trb * LANES * 4
    cost = pl.CostEstimate(
        flops=int((3 * C + 45 * B + 40) * m_pad),
        transcendentals=int((4 + B) * m_pad),
        bytes_accessed=int(2 * m_pad * D * 4 + NUM_CORES * SLAB * LANES * 4),
    )

    partial_sums = pl.pallas_call(
        kernel,
        out_shape=jax.ShapeDtypeStruct((NUM_CORES * SLAB, LANES), jnp.float32),
        grid=(NUM_CORES, steps),
        in_specs=[
            pl.BlockSpec((D, trb, LANES), lambda c, i: (0, c * steps + i, 0)),
            pl.BlockSpec((D, trb, LANES), lambda c, i: (0, c * steps + i, 0)),
        ],
        out_specs=pl.BlockSpec((SLAB, LANES), lambda c, i: (c, 0)),
        compiler_params=pltpu.CompilerParams(
            dimension_semantics=("parallel", "arbitrary"),
            # 2 inputs x double-buffer + headroom; capped for v7x's 64 MiB VMEM.
            vmem_limit_bytes=int(min(40 << 20, 4 * block_bytes + (8 << 20))),
        ),
        cost_estimate=cost,
    )(pred_fm, tgt_fm)

    # final cross-lane reduction + 1/N scaling in the wrapper
    return jnp.sum(partial_sums) / jnp.float32(N)


def yolo_loss_ref(prediction_matrix, target_matrix, *, S, B, C):
    """Pure-JAX reference mirroring the PyTorch semantics."""
    N = prediction_matrix.shape[0]
    D = C + 5 * B
    p = prediction_matrix.reshape(N, S, S, D).astype(jnp.float32)
    t = target_matrix.astype(jnp.float32)
    obj = t[..., C] > 0.0

    cls = jnp.sum(jnp.where(obj[..., None], (p[..., :C] - t[..., :C]) ** 2, 0.0))

    def xyxy(box):
        x = box[..., 1] / S
        y = box[..., 2] / S
        w = box[..., 3]
        h = box[..., 4]
        return x - 0.5 * w, y - 0.5 * h, x + 0.5 * w, y + 0.5 * h

    tx1, ty1, tx2, ty2 = xyxy(t[..., C:C + 5])
    t_area = (tx2 - tx1) * (ty2 - ty1)

    noobj = 0.0
    ious = []
    for b in range(B):
        idx = C + 5 * b
        noobj = noobj + jnp.sum(
            jnp.where(obj, 0.0, (p[..., idx] - t[..., idx]) ** 2))
        px1, py1, px2, py2 = xyxy(p[..., idx:idx + 5])
        iw = jnp.maximum(jnp.minimum(px2, tx2) - jnp.maximum(px1, tx1), 0.0)
        ih = jnp.maximum(jnp.minimum(py2, ty2) - jnp.maximum(py1, ty1), 0.0)
        inter = iw * ih
        p_area = (px2 - px1) * (py2 - py1)
        ious.append(inter / (p_area + t_area - inter))

    rp = p[..., C:C + 5]
    rt = t[..., C:C + 5]
    best = ious[0]
    for b in range(1, B):
        better = ious[b] > best
        best = jnp.where(better, ious[b], best)
        rp = jnp.where(better[..., None], p[..., C + 5 * b:C + 5 * b + 5], rp)
        rt = jnp.where(better[..., None], t[..., C + 5 * b:C + 5 * b + 5], rt)

    xy = jnp.sum(jnp.where(obj, (rp[..., 1] - rt[..., 1]) ** 2
                           + (rp[..., 2] - rt[..., 2]) ** 2, 0.0))
    wh = jnp.sum(jnp.where(obj,
                           (jnp.sqrt(rp[..., 3]) - jnp.sqrt(rt[..., 3])) ** 2
                           + (jnp.sqrt(rp[..., 4]) - jnp.sqrt(rt[..., 4])) ** 2,
                           0.0))
    ob = jnp.sum(jnp.where(obj, (rp[..., 0] - rt[..., 0]) ** 2, 0.0))
    return (COORD * (xy + wh) + ob + NOOBJ * noobj + cls) / float(N)


def _make_inputs(key, N, S, B, C):
    D = C + 5 * B
    kp, kt, ko = jax.random.split(key, 3)
    # Predictions kept positive so sqrt(w), sqrt(h) stay finite (as the
    # original loss implicitly assumes).
    pred = jax.random.uniform(kp, (N, S * S * D), dtype=jnp.float32,
                              minval=0.01, maxval=1.0)
    target = jax.random.uniform(kt, (N, S, S, D), dtype=jnp.float32,
                                minval=0.01, maxval=1.0)
    # Roughly half the cells contain an object (target box-0 confidence = 1).
    obj_cells = jax.random.uniform(ko, (N, S, S)) > 0.5
    target = target.at[..., C].set(jnp.where(obj_cells, 1.0, 0.0))
    return pred, target


if __name__ == "__main__":
    key = jax.random.PRNGKey(0)
    k1, k2 = jax.random.split(key)

    # Small, module-consistent shapes: S grid cells, B boxes, C classes.
    S, B, C, N = 4, 2, 4, 2
    pred, target = _make_inputs(k1, N, S, B, C)
    loss_fn = jax.jit(functools.partial(yolo_loss, S=S, B=B, C=C))
    loss = jax.block_until_ready(loss_fn(pred, target))
    ref = yolo_loss_ref(pred, target, S=S, B=B, C=C)
    np.testing.assert_allclose(float(loss), float(ref), rtol=1e-4, atol=1e-4)
    assert np.isfinite(float(loss))

    # A second, YOLO-like configuration to exercise D=30 and the slab loop.
    S2, B2, C2, N2 = 7, 2, 20, 8
    pred2, target2 = _make_inputs(k2, N2, S2, B2, C2)
    loss_fn2 = jax.jit(functools.partial(yolo_loss, S=S2, B=B2, C=C2))
    loss2 = jax.block_until_ready(loss_fn2(pred2, target2))
    ref2 = yolo_loss_ref(pred2, target2, S=S2, B=B2, C=C2)
    np.testing.assert_allclose(float(loss2), float(ref2), rtol=1e-4, atol=1e-4)
    assert np.isfinite(float(loss2))

    print("KERNEL_OK")
</pallas_src>

<mosaic_0001>
module attributes {stable_mosaic.version = 11 : i64} {
  func.func @_yolo_loss_kernel(%arg0: i32, %arg1: i32, %arg2: memref<14x8x128xf32, #tpu.memory_space<vmem>>, %arg3: memref<14x8x128xf32, #tpu.memory_space<vmem>>, %arg4: memref<8x128xf32, #tpu.memory_space<vmem>>) attributes {dimension_semantics = [#tpu.dimension_semantics<parallel>, #tpu.dimension_semantics<arbitrary>], iteration_bounds = array<i64: 2, 1>, scalar_prefetch = 0 : i64, scratch_operands = 0 : i64, tpu.core_type = #tpu.core_type<tc>, window_params = [{transform_indices = @transform_0, window_bounds = array<i64: 14, 8, 128>}, {transform_indices = @transform_1, window_bounds = array<i64: 14, 8, 128>}, {transform_indices = @transform_2, window_bounds = array<i64: 8, 128>}]} {
    %c0_i32 = arith.constant 0 : i32
    %0 = arith.cmpi eq, %arg1, %c0_i32 : i32
    %1 = arith.extui %0 : i1 to i32
    %c0_i32_0 = arith.constant 0 : i32
    %2 = arith.cmpi ne, %1, %c0_i32_0 : i32
    scf.if %2 {
      %cst_74 = arith.constant 0.000000e+00 : f32
      %255 = vector.broadcast %cst_74 : f32 to vector<8x128xf32>
      %c0_75 = arith.constant 0 : index
      %c0_76 = arith.constant 0 : index
      %256 = vector.load %arg4[%c0_75, %c0_76] : memref<8x128xf32, #tpu.memory_space<vmem>>, vector<8x128xf32>
      tpu.vector_store %arg4[%c0_75, %c0_76], %255 {strides = array<i32>} : memref<8x128xf32, #tpu.memory_space<vmem>>, vector<8x128xf32>,
    } else {
    }
    %cst = arith.constant 0.000000e+00 : f32
    %3 = vector.broadcast %cst : f32 to vector<8x128xf32>
    %cst_1 = arith.constant 2.500000e-01 : f32
    %c0_i32_2 = arith.constant 0 : i32
    %c8_i32 = arith.constant 8 : i32
    %4 = arith.muli %c0_i32_2, %c8_i32 : i32
    %5 = tpu.assume_multiple %4, 8 : i32
    %c4 = arith.constant 4 : index
    %6 = arith.index_cast %5 : i32 to index
    %c0 = arith.constant 0 : index
    %7 = vector.load %arg3[%c4, %6, %c0] : memref<14x8x128xf32, #tpu.memory_space<vmem>>, vector<1x8x128xf32>
    %8 = vector.shape_cast %7 : vector<1x8x128xf32> to vector<8x128xf32>
    %cst_3 = arith.constant 0.000000e+00 : f32
    %9 = vector.broadcast %cst_3 : f32 to vector<8x128xf32>
    %10 = arith.cmpf ogt, %8, %9 : vector<8x128xf32>
    %c0_4 = arith.constant 0 : index
    %11 = arith.index_cast %5 : i32 to index
    %c0_5 = arith.constant 0 : index
    %12 = vector.load %arg2[%c0_4, %11, %c0_5] : memref<14x8x128xf32, #tpu.memory_space<vmem>>, vector<1x8x128xf32>
    %13 = vector.shape_cast %12 : vector<1x8x128xf32> to vector<8x128xf32>
    %c0_6 = arith.constant 0 : index
    %14 = arith.index_cast %5 : i32 to index
    %c0_7 = arith.constant 0 : index
    %15 = vector.load %arg3[%c0_6, %14, %c0_7] : memref<14x8x128xf32, #tpu.memory_space<vmem>>, vector<1x8x128xf32>
    %16 = vector.shape_cast %15 : vector<1x8x128xf32> to vector<8x128xf32>
    %17 = arith.subf %13, %16 : vector<8x128xf32>
    %18 = arith.mulf %17, %17 : vector<8x128xf32>
    %c1 = arith.constant 1 : index
    %19 = arith.index_cast %5 : i32 to index
    %c0_8 = arith.constant 0 : index
    %20 = vector.load %arg2[%c1, %19, %c0_8] : memref<14x8x128xf32, #tpu.memory_space<vmem>>, vector<1x8x128xf32>
    %21 = vector.shape_cast %20 : vector<1x8x128xf32> to vector<8x128xf32>
    %c1_9 = arith.constant 1 : index
    %22 = arith.index_cast %5 : i32 to index
    %c0_10 = arith.constant 0 : index
    %23 = vector.load %arg3[%c1_9, %22, %c0_10] : memref<14x8x128xf32, #tpu.memory_space<vmem>>, vector<1x8x128xf32>
    %24 = vector.shape_cast %23 : vector<1x8x128xf32> to vector<8x128xf32>
    %25 = arith.subf %21, %24 : vector<8x128xf32>
    %26 = arith.mulf %25, %25 : vector<8x128xf32>
    %c2 = arith.constant 2 : index
    %27 = arith.index_cast %5 : i32 to index
    %c0_11 = arith.constant 0 : index
    %28 = vector.load %arg2[%c2, %27, %c0_11] : memref<14x8x128xf32, #tpu.memory_space<vmem>>, vector<1x8x128xf32>
    %29 = vector.shape_cast %28 : vector<1x8x128xf32> to vector<8x128xf32>
    %c2_12 = arith.constant 2 : index
    %30 = arith.index_cast %5 : i32 to index
    %c0_13 = arith.constant 0 : index
    %31 = vector.load %arg3[%c2_12, %30, %c0_13] : memref<14x8x128xf32, #tpu.memory_space<vmem>>, vector<1x8x128xf32>
    %32 = vector.shape_cast %31 : vector<1x8x128xf32> to vector<8x128xf32>
    %33 = arith.subf %29, %32 : vector<8x128xf32>
    %34 = arith.mulf %33, %33 : vector<8x128xf32>
    %c3 = arith.constant 3 : index
    %35 = arith.index_cast %5 : i32 to index
    %c0_14 = arith.constant 0 : index
    %36 = vector.load %arg2[%c3, %35, %c0_14] : memref<14x8x128xf32, #tpu.memory_space<vmem>>, vector<1x8x128xf32>
    %37 = vector.shape_cast %36 : vector<1x8x128xf32> to vector<8x128xf32>
    %c3_15 = arith.constant 3 : index
    %38 = arith.index_cast %5 : i32 to index
    %c0_16 = arith.constant 0 : index
    %39 = vector.load %arg3[%c3_15, %38, %c0_16] : memref<14x8x128xf32, #tpu.memory_space<vmem>>, vector<1x8x128xf32>
    %40 = vector.shape_cast %39 : vector<1x8x128xf32> to vector<8x128xf32>
    %41 = arith.subf %37, %40 : vector<8x128xf32>
    %42 = arith.mulf %41, %41 : vector<8x128xf32>
    %43 = arith.addf %18, %26 : vector<8x128xf32>
    %44 = arith.addf %34, %42 : vector<8x128xf32>
    %45 = arith.addf %43, %44 : vector<8x128xf32>
    %c5 = arith.constant 5 : index
    %46 = arith.index_cast %5 : i32 to index
    %c0_17 = arith.constant 0 : index
    %47 = vector.load %arg3[%c5, %46, %c0_17] : memref<14x8x128xf32, #tpu.memory_space<vmem>>, vector<1x8x128xf32>
    %48 = vector.shape_cast %47 : vector<1x8x128xf32> to vector<8x128xf32>
    %c6 = arith.constant 6 : index
    %49 = arith.index_cast %5 : i32 to index
    %c0_18 = arith.constant 0 : index
    %50 = vector.load %arg3[%c6, %49, %c0_18] : memref<14x8x128xf32, #tpu.memory_space<vmem>>, vector<1x8x128xf32>
    %51 = vector.shape_cast %50 : vector<1x8x128xf32> to vector<8x128xf32>
    %c7 = arith.constant 7 : index
    %52 = arith.index_cast %5 : i32 to index
    %c0_19 = arith.constant 0 : index
    %53 = vector.load %arg3[%c7, %52, %c0_19] : memref<14x8x128xf32, #tpu.memory_space<vmem>>, vector<1x8x128xf32>
    %54 = vector.shape_cast %53 : vector<1x8x128xf32> to vector<8x128xf32>
    %c8 = arith.constant 8 : index
    %55 = arith.index_cast %5 : i32 to index
    %c0_20 = arith.constant 0 : index
    %56 = vector.load %arg3[%c8, %55, %c0_20] : memref<14x8x128xf32, #tpu.memory_space<vmem>>, vector<1x8x128xf32>
    %57 = vector.shape_cast %56 : vector<1x8x128xf32> to vector<8x128xf32>
    %58 = vector.broadcast %cst_1 : f32 to vector<8x128xf32>
    %59 = arith.mulf %48, %58 : vector<8x128xf32>
    %cst_21 = arith.constant 5.000000e-01 : f32
    %60 = vector.broadcast %cst_21 : f32 to vector<8x128xf32>
    %61 = arith.mulf %60, %54 : vector<8x128xf32>
    %62 = arith.subf %59, %61 : vector<8x128xf32>
    %63 = vector.broadcast %cst_1 : f32 to vector<8x128xf32>
    %64 = arith.mulf %48, %63 : vector<8x128xf32>
    %cst_22 = arith.constant 5.000000e-01 : f32
    %65 = vector.broadcast %cst_22 : f32 to vector<8x128xf32>
    %66 = arith.mulf %65, %54 : vector<8x128xf32>
    %67 = arith.addf %64, %66 : vector<8x128xf32>
    %68 = vector.broadcast %cst_1 : f32 to vector<8x128xf32>
    %69 = arith.mulf %51, %68 : vector<8x128xf32>
    %cst_23 = arith.constant 5.000000e-01 : f32
    %70 = vector.broadcast %cst_23 : f32 to vector<8x128xf32>
    %71 = arith.mulf %70, %57 : vector<8x128xf32>
    %72 = arith.subf %69, %71 : vector<8x128xf32>
    %73 = vector.broadcast %cst_1 : f32 to vector<8x128xf32>
    %74 = arith.mulf %51, %73 : vector<8x128xf32>
    %cst_24 = arith.constant 5.000000e-01 : f32
    %75 = vector.broadcast %cst_24 : f32 to vector<8x128xf32>
    %76 = arith.mulf %75, %57 : vector<8x128xf32>
    %77 = arith.addf %74, %76 : vector<8x128xf32>
    %78 = arith.subf %67, %62 : vector<8x128xf32>
    %79 = arith.subf %77, %72 : vector<8x128xf32>
    %80 = arith.mulf %78, %79 : vector<8x128xf32>
    %c4_25 = arith.constant 4 : index
    %81 = arith.index_cast %5 : i32 to index
    %c0_26 = arith.constant 0 : index
    %82 = vector.load %arg2[%c4_25, %81, %c0_26] : memref<14x8x128xf32, #tpu.memory_space<vmem>>, vector<1x8x128xf32>
    %83 = vector.shape_cast %82 : vector<1x8x128xf32> to vector<8x128xf32>
    %c4_27 = arith.constant 4 : index
    %84 = arith.index_cast %5 : i32 to index
    %c0_28 = arith.constant 0 : index
    %85 = vector.load %arg3[%c4_27, %84, %c0_28] : memref<14x8x128xf32, #tpu.memory_space<vmem>>, vector<1x8x128xf32>
    %86 = vector.shape_cast %85 : vector<1x8x128xf32> to vector<8x128xf32>
    %87 = arith.subf %83, %86 : vector<8x128xf32>
    %88 = arith.mulf %87, %87 : vector<8x128xf32>
    %c5_29 = arith.constant 5 : index
    %89 = arith.index_cast %5 : i32 to index
    %c0_30 = arith.constant 0 : index
    %90 = vector.load %arg2[%c5_29, %89, %c0_30] : memref<14x8x128xf32, #tpu.memory_space<vmem>>, vector<1x8x128xf32>
    %91 = vector.shape_cast %90 : vector<1x8x128xf32> to vector<8x128xf32>
    %c6_31 = arith.constant 6 : index
    %92 = arith.index_cast %5 : i32 to index
    %c0_32 = arith.constant 0 : index
    %93 = vector.load %arg2[%c6_31, %92, %c0_32] : memref<14x8x128xf32, #tpu.memory_space<vmem>>, vector<1x8x128xf32>
    %94 = vector.shape_cast %93 : vector<1x8x128xf32> to vector<8x128xf32>
    %c7_33 = arith.constant 7 : index
    %95 = arith.index_cast %5 : i32 to index
    %c0_34 = arith.constant 0 : index
    %96 = vector.load %arg2[%c7_33, %95, %c0_34] : memref<14x8x128xf32, #tpu.memory_space<vmem>>, vector<1x8x128xf32>
    %97 = vector.shape_cast %96 : vector<1x8x128xf32> to vector<8x128xf32>
    %c8_35 = arith.constant 8 : index
    %98 = arith.index_cast %5 : i32 to index
    %c0_36 = arith.constant 0 : index
    %99 = vector.load %arg2[%c8_35, %98, %c0_36] : memref<14x8x128xf32, #tpu.memory_space<vmem>>, vector<1x8x128xf32>
    %100 = vector.shape_cast %99 : vector<1x8x128xf32> to vector<8x128xf32>
    %101 = vector.broadcast %cst_1 : f32 to vector<8x128xf32>
    %102 = arith.mulf %91, %101 : vector<8x128xf32>
    %cst_37 = arith.constant 5.000000e-01 : f32
    %103 = vector.broadcast %cst_37 : f32 to vector<8x128xf32>
    %104 = arith.mulf %103, %97 : vector<8x128xf32>
    %105 = arith.subf %102, %104 : vector<8x128xf32>
    %106 = vector.broadcast %cst_1 : f32 to vector<8x128xf32>
    %107 = arith.mulf %91, %106 : vector<8x128xf32>
    %cst_38 = arith.constant 5.000000e-01 : f32
    %108 = vector.broadcast %cst_38 : f32 to vector<8x128xf32>
    %109 = arith.mulf %108, %97 : vector<8x128xf32>
    %110 = arith.addf %107, %109 : vector<8x128xf32>
    %111 = vector.broadcast %cst_1 : f32 to vector<8x128xf32>
    %112 = arith.mulf %94, %111 : vector<8x128xf32>
    %cst_39 = arith.constant 5.000000e-01 : f32
    %113 = vector.broadcast %cst_39 : f32 to vector<8x128xf32>
    %114 = arith.mulf %113, %100 : vector<8x128xf32>
    %115 = arith.subf %112, %114 : vector<8x128xf32>
    %116 = vector.broadcast %cst_1 : f32 to vector<8x128xf32>
    %117 = arith.mulf %94, %116 : vector<8x128xf32>
    %cst_40 = arith.constant 5.000000e-01 : f32
    %118 = vector.broadcast %cst_40 : f32 to vector<8x128xf32>
    %119 = arith.mulf %118, %100 : vector<8x128xf32>
    %120 = arith.addf %117, %119 : vector<8x128xf32>
    %121 = arith.minimumf %110, %67 : vector<8x128xf32>
    %122 = arith.maximumf %105, %62 : vector<8x128xf32>
    %123 = arith.subf %121, %122 : vector<8x128xf32>
    %cst_41 = arith.constant 0.000000e+00 : f32
    %124 = vector.broadcast %cst_41 : f32 to vector<8x128xf32>
    %125 = arith.maximumf %123, %124 : vector<8x128xf32>
    %126 = arith.minimumf %120, %77 : vector<8x128xf32>
    %127 = arith.maximumf %115, %72 : vector<8x128xf32>
    %128 = arith.subf %126, %127 : vector<8x128xf32>
    %cst_42 = arith.constant 0.000000e+00 : f32
    %129 = vector.broadcast %cst_42 : f32 to vector<8x128xf32>
    %130 = arith.maximumf %128, %129 : vector<8x128xf32>
    %131 = arith.mulf %125, %130 : vector<8x128xf32>
    %132 = arith.subf %110, %105 : vector<8x128xf32>
    %133 = arith.subf %120, %115 : vector<8x128xf32>
    %134 = arith.mulf %132, %133 : vector<8x128xf32>
    %135 = arith.addf %134, %80 : vector<8x128xf32>
    %136 = arith.subf %135, %131 : vector<8x128xf32>
    %cst_43 = arith.constant 0.000000e+00 : f32
    %137 = vector.broadcast %cst_43 : f32 to vector<8x128xf32>
    %138 = arith.cmpf ogt, %136, %137 : vector<8x128xf32>
    %cst_44 = arith.constant 1.000000e+00 : f32
    %139 = vector.broadcast %cst_44 : f32 to vector<8x128xf32>
    %140 = arith.select %138, %136, %139 : vector<8x128xi1>, vector<8x128xf32>
    %141 = arith.divf %131, %140 : vector<8x128xf32>
    %c9 = arith.constant 9 : index
    %142 = arith.index_cast %5 : i32 to index
    %c0_45 = arith.constant 0 : index
    %143 = vector.load %arg2[%c9, %142, %c0_45] : memref<14x8x128xf32, #tpu.memory_space<vmem>>, vector<1x8x128xf32>
    %144 = vector.shape_cast %143 : vector<1x8x128xf32> to vector<8x128xf32>
    %c9_46 = arith.constant 9 : index
    %145 = arith.index_cast %5 : i32 to index
    %c0_47 = arith.constant 0 : index
    %146 = vector.load %arg3[%c9_46, %145, %c0_47] : memref<14x8x128xf32, #tpu.memory_space<vmem>>, vector<1x8x128xf32>
    %147 = vector.shape_cast %146 : vector<1x8x128xf32> to vector<8x128xf32>
    %148 = arith.subf %144, %147 : vector<8x128xf32>
    %149 = arith.mulf %148, %148 : vector<8x128xf32>
    %c10 = arith.constant 10 : index
    %150 = arith.index_cast %5 : i32 to index
    %c0_48 = arith.constant 0 : index
    %151 = vector.load %arg2[%c10, %150, %c0_48] : memref<14x8x128xf32, #tpu.memory_space<vmem>>, vector<1x8x128xf32>
    %152 = vector.shape_cast %151 : vector<1x8x128xf32> to vector<8x128xf32>
    %c11 = arith.constant 11 : index
    %153 = arith.index_cast %5 : i32 to index
    %c0_49 = arith.constant 0 : index
    %154 = vector.load %arg2[%c11, %153, %c0_49] : memref<14x8x128xf32, #tpu.memory_space<vmem>>, vector<1x8x128xf32>
    %155 = vector.shape_cast %154 : vector<1x8x128xf32> to vector<8x128xf32>
    %c12 = arith.constant 12 : index
    %156 = arith.index_cast %5 : i32 to index
    %c0_50 = arith.constant 0 : index
    %157 = vector.load %arg2[%c12, %156, %c0_50] : memref<14x8x128xf32, #tpu.memory_space<vmem>>, vector<1x8x128xf32>
    %158 = vector.shape_cast %157 : vector<1x8x128xf32> to vector<8x128xf32>
    %c13 = arith.constant 13 : index
    %159 = arith.index_cast %5 : i32 to index
    %c0_51 = arith.constant 0 : index
    %160 = vector.load %arg2[%c13, %159, %c0_51] : memref<14x8x128xf32, #tpu.memory_space<vmem>>, vector<1x8x128xf32>
    %161 = vector.shape_cast %160 : vector<1x8x128xf32> to vector<8x128xf32>
    %162 = vector.broadcast %cst_1 : f32 to vector<8x128xf32>
    %163 = arith.mulf %152, %162 : vector<8x128xf32>
    %cst_52 = arith.constant 5.000000e-01 : f32
    %164 = vector.broadcast %cst_52 : f32 to vector<8x128xf32>
    %165 = arith.mulf %164, %158 : vector<8x128xf32>
    %166 = arith.subf %163, %165 : vector<8x128xf32>
    %167 = vector.broadcast %cst_1 : f32 to vector<8x128xf32>
    %168 = arith.mulf %152, %167 : vector<8x128xf32>
    %cst_53 = arith.constant 5.000000e-01 : f32
    %169 = vector.broadcast %cst_53 : f32 to vector<8x128xf32>
    %170 = arith.mulf %169, %158 : vector<8x128xf32>
    %171 = arith.addf %168, %170 : vector<8x128xf32>
    %172 = vector.broadcast %cst_1 : f32 to vector<8x128xf32>
    %173 = arith.mulf %155, %172 : vector<8x128xf32>
    %cst_54 = arith.constant 5.000000e-01 : f32
    %174 = vector.broadcast %cst_54 : f32 to vector<8x128xf32>
    %175 = arith.mulf %174, %161 : vector<8x128xf32>
    %176 = arith.subf %173, %175 : vector<8x128xf32>
    %177 = vector.broadcast %cst_1 : f32 to vector<8x128xf32>
    %178 = arith.mulf %155, %177 : vector<8x128xf32>
    %cst_55 = arith.constant 5.000000e-01 : f32
    %179 = vector.broadcast %cst_55 : f32 to vector<8x128xf32>
    %180 = arith.mulf %179, %161 : vector<8x128xf32>
    %181 = arith.addf %178, %180 : vector<8x128xf32>
    %182 = arith.minimumf %171, %67 : vector<8x128xf32>
    %183 = arith.maximumf %166, %62 : vector<8x128xf32>
    %184 = arith.subf %182, %183 : vector<8x128xf32>
    %cst_56 = arith.constant 0.000000e+00 : f32
    %185 = vector.broadcast %cst_56 : f32 to vector<8x128xf32>
    %186 = arith.maximumf %184, %185 : vector<8x128xf32>
    %187 = arith.minimumf %181, %77 : vector<8x128xf32>
    %188 = arith.maximumf %176, %72 : vector<8x128xf32>
    %189 = arith.subf %187, %188 : vector<8x128xf32>
    %cst_57 = arith.constant 0.000000e+00 : f32
    %190 = vector.broadcast %cst_57 : f32 to vector<8x128xf32>
    %191 = arith.maximumf %189, %190 : vector<8x128xf32>
    %192 = arith.mulf %186, %191 : vector<8x128xf32>
    %193 = arith.subf %171, %166 : vector<8x128xf32>
    %194 = arith.subf %181, %176 : vector<8x128xf32>
    %195 = arith.mulf %193, %194 : vector<8x128xf32>
    %196 = arith.addf %195, %80 : vector<8x128xf32>
    %197 = arith.subf %196, %192 : vector<8x128xf32>
    %cst_58 = arith.constant 0.000000e+00 : f32
    %198 = vector.broadcast %cst_58 : f32 to vector<8x128xf32>
    %199 = arith.cmpf ogt, %197, %198 : vector<8x128xf32>
    %cst_59 = arith.constant 1.000000e+00 : f32
    %200 = vector.broadcast %cst_59 : f32 to vector<8x128xf32>
    %201 = arith.select %199, %197, %200 : vector<8x128xi1>, vector<8x128xf32>
    %202 = arith.divf %192, %201 : vector<8x128xf32>
    %c10_60 = arith.constant 10 : index
    %203 = arith.index_cast %5 : i32 to index
    %c0_61 = arith.constant 0 : index
    %204 = vector.load %arg3[%c10_60, %203, %c0_61] : memref<14x8x128xf32, #tpu.memory_space<vmem>>, vector<1x8x128xf32>
    %205 = vector.shape_cast %204 : vector<1x8x128xf32> to vector<8x128xf32>
    %c11_62 = arith.constant 11 : index
    %206 = arith.index_cast %5 : i32 to index
    %c0_63 = arith.constant 0 : index
    %207 = vector.load %arg3[%c11_62, %206, %c0_63] : memref<14x8x128xf32, #tpu.memory_space<vmem>>, vector<1x8x128xf32>
    %208 = vector.shape_cast %207 : vector<1x8x128xf32> to vector<8x128xf32>
    %c12_64 = arith.constant 12 : index
    %209 = arith.index_cast %5 : i32 to index
    %c0_65 = arith.constant 0 : index
    %210 = vector.load %arg3[%c12_64, %209, %c0_65] : memref<14x8x128xf32, #tpu.memory_space<vmem>>, vector<1x8x128xf32>
    %211 = vector.shape_cast %210 : vector<1x8x128xf32> to vector<8x128xf32>
    %c13_66 = arith.constant 13 : index
    %212 = arith.index_cast %5 : i32 to index
    %c0_67 = arith.constant 0 : index
    %213 = vector.load %arg3[%c13_66, %212, %c0_67] : memref<14x8x128xf32, #tpu.memory_space<vmem>>, vector<1x8x128xf32>
    %214 = vector.shape_cast %213 : vector<1x8x128xf32> to vector<8x128xf32>
    %215 = arith.cmpf ogt, %202, %141 : vector<8x128xf32>
    %216 = arith.select %215, %144, %83 : vector<8x128xi1>, vector<8x128xf32>
    %217 = arith.select %215, %152, %91 : vector<8x128xi1>, vector<8x128xf32>
    %218 = arith.select %215, %155, %94 : vector<8x128xi1>, vector<8x128xf32>
    %219 = arith.select %215, %158, %97 : vector<8x128xi1>, vector<8x128xf32>
    %220 = arith.select %215, %161, %100 : vector<8x128xi1>, vector<8x128xf32>
    %221 = arith.select %215, %147, %86 : vector<8x128xi1>, vector<8x128xf32>
    %222 = arith.select %215, %205, %48 : vector<8x128xi1>, vector<8x128xf32>
    %223 = arith.select %215, %208, %51 : vector<8x128xi1>, vector<8x128xf32>
    %224 = arith.select %215, %211, %54 : vector<8x128xi1>, vector<8x128xf32>
    %225 = arith.select %215, %214, %57 : vector<8x128xi1>, vector<8x128xf32>
    %226 = arith.subf %217, %222 : vector<8x128xf32>
    %227 = arith.mulf %226, %226 : vector<8x128xf32>
    %228 = arith.subf %218, %223 : vector<8x128xf32>
    %229 = arith.mulf %228, %228 : vector<8x128xf32>
    %230 = arith.addf %227, %229 : vector<8x128xf32>
    %231 = math.sqrt %219 : vector<8x128xf32>
    %232 = math.sqrt %224 : vector<8x128xf32>
    %233 = arith.subf %231, %232 : vector<8x128xf32>
    %234 = arith.mulf %233, %233 : vector<8x128xf32>
    %235 = math.sqrt %220 : vector<8x128xf32>
    %236 = math.sqrt %225 : vector<8x128xf32>
    %237 = arith.subf %235, %236 : vector<8x128xf32>
    %238 = arith.mulf %237, %237 : vector<8x128xf32>
    %239 = arith.addf %234, %238 : vector<8x128xf32>
    %240 = arith.subf %216, %221 : vector<8x128xf32>
    %241 = arith.mulf %240, %240 : vector<8x128xf32>
    %242 = arith.addf %88, %149 : vector<8x128xf32>
    %243 = arith.addf %230, %239 : vector<8x128xf32>
    %cst_68 = arith.constant 5.000000e+00 : f32
    %244 = vector.broadcast %cst_68 : f32 to vector<8x128xf32>
    %245 = arith.mulf %244, %243 : vector<8x128xf32>
    %246 = arith.addf %245, %241 : vector<8x128xf32>
    %247 = arith.addf %246, %45 : vector<8x128xf32>
    %cst_69 = arith.constant 5.000000e-01 : f32
    %248 = vector.broadcast %cst_69 : f32 to vector<8x128xf32>
    %249 = arith.mulf %248, %242 : vector<8x128xf32>
    %250 = arith.select %10, %247, %249 : vector<8x128xi1>, vector<8x128xf32>
    %251 = arith.addf %3, %250 : vector<8x128xf32>
    %c1_i32 = arith.constant 1 : i32
    %c0_70 = arith.constant 0 : index
    %c0_71 = arith.constant 0 : index
    %252 = vector.load %arg4[%c0_70, %c0_71] : memref<8x128xf32, #tpu.memory_space<vmem>>, vector<8x128xf32>
    %253 = arith.addf %252, %251 : vector<8x128xf32>
    %c0_72 = arith.constant 0 : index
    %c0_73 = arith.constant 0 : index
    %254 = vector.load %arg4[%c0_72, %c0_73] : memref<8x128xf32, #tpu.memory_space<vmem>>, vector<8x128xf32>
    tpu.vector_store %arg4[%c0_72, %c0_73], %253 {strides = array<i32>} : memref<8x128xf32, #tpu.memory_space<vmem>>, vector<8x128xf32>,
    return
  }
  func.func @transform_0(%arg0: i32, %arg1: i32) -> (i32, i32, i32) {
    %c1_i32 = arith.constant 1 : i32
    %0 = arith.muli %arg0, %c1_i32 : i32
    %1 = arith.addi %0, %arg1 : i32
    %c0_i32 = arith.constant 0 : i32
    %c0_i32_0 = arith.constant 0 : i32
    %c0_i32_1 = arith.constant 0 : i32
    return %c0_i32, %1, %c0_i32_0 : i32, i32, i32
  }
  func.func @transform_1(%arg0: i32, %arg1: i32) -> (i32, i32, i32) {
    %c1_i32 = arith.constant 1 : i32
    %0 = arith.muli %arg0, %c1_i32 : i32
    %1 = arith.addi %0, %arg1 : i32
    %c0_i32 = arith.constant 0 : i32
    %c0_i32_0 = arith.constant 0 : i32
    %c0_i32_1 = arith.constant 0 : i32
    return %c0_i32, %1, %c0_i32_0 : i32, i32, i32
  }
  func.func @transform_2(%arg0: i32, %arg1: i32) -> (i32, i32) {
    %c0_i32 = arith.constant 0 : i32
    %c0_i32_0 = arith.constant 0 : i32
    return %arg0, %c0_i32 : i32, i32
  }
}

</mosaic_0001>

<llo_original>
// kernel: yolo_loss.1
$region0: #{yolo_loss.1}
  #allocation0 [shape = 'u32[]', space=smem, size = 0x4, offset = 0x4, fixed_abs, tag = 'smem constant byte address 0x4 - core index']
  #allocation1 [shape = 'u32[144,128]{1,0:T(1,128)}', space=vmem, size = 0x12000, scoped, tag = 'internal scratch']
  %s0 = inlined_call_operand.vmem [shape: f32[14,16,128], index: 0, kind: input, shape index: {}]
  %s1 = inlined_call_operand.vmem [shape: f32[14,16,128], index: 1, kind: input, shape index: {}]
  %s2 = inlined_call_operand.vmem [shape: f32[16,128], index: 2, kind: output, shape index: {}]
  %s3 = sld [smem:[#allocation0]]
  $region121: #{yolo_loss.1} parent=0
    _
  %s5 = ssub.s32 1, %s3
  %s6 = scalar_select 0, %s5, %s3
  $region1: #{yolo_loss.1} parent=0
    #allocation2 [shape = 'u8[114688]{0}', space=vmem, size = 0x1c000, scoped, tag = 'input window, operand 0']
    #allocation3 [shape = 'u8[114688]{0}', space=vmem, size = 0x1c000, scoped, tag = 'input window, operand 1']
    loop: start=0, step=1, limit=4
    $region2: #{yolo_loss.1} parent=1 // loop_pre_header
      _
    $region3: #{yolo_loss.1} parent=1 // loop_header
      %s8 = sphi 0, %s12
      %p9 = scmp.ge.s32.totalorder %s8, 4
      %s15 = sphi 0, %s27
      %s16 = sphi 0, %s23
      %s17 = sphi 0, %s15
      %s18 = sphi 0, %s16
      %s19 = sphi 0, %s17
      %s20 = sphi 0, %s18
      %s32 = sphi 0, %s34
      %s35 = sphi 0, %s32
      %s36 = sphi 0, %s35
      %s52 = sphi 0, %s36
      %s60 = sphi 0, %s62
      %s63 = sphi 0, %s60
      %s64 = sphi 0, %s63
      %s80 = sphi 0, %s64
      %s86 = sphi 0, %s88
      %s89 = sphi 0, %s86
      %s90 = sphi 0, %s89
      %s106 = sphi 0, %s90
    $region4: #{yolo_loss.1} parent=1 // loop_header_branch
      %11 = sbr.rel (%p9) target = $region8
    $region5: #{yolo_loss.1} parent=1 // loop_body
      %s13 = ssub.s32 %s8, 1
      %s14 = ssub.s32 %s8, 2
      %s21 = sadd.s32 1, %s16
      %p22 = scmp.ge.s32.totalorder %s21, 1
      %s23 = scalar_select %p22, 0, %s21
      %s24 = sadd.s32 1, %s15
      %s25 = scalar_select %p22, %s24, %s15
      %p26 = scmp.ge.s32.totalorder %s25, 2
      %s27 = scalar_select %p26, 0, %s25
      %s28 = sadd.s32 %s15, %s16
      %s29 = sadd.s32 %s27, %s23
      %s30 = ssub.s32 %s28, %s29
      %p31 = scmp.eq.s32.totalorder %s30, 0
      %s33 = sadd.s32 %s32, 1
      %s34 = scalar_select %p31, %s32, %s33
      %p37 = pneg %p31
      %p38 = scmp.eq.s32.totalorder %s8, 1
      %p39 = por %p37, %p38
      %p40 = scmp.ne.s32.totalorder %s32, %s35
      %p41 = scmp.eq.s32.totalorder %s8, 0
      %p42 = por %p40, %p41
      %p43 = scmp.ne.s32.totalorder %s32, %s35
      %p44 = scmp.eq.s32.totalorder %s13, 1
      %p45 = por %p43, %p44
      %p46 = scmp.ne.s32.totalorder %s35, %s36
      %p47 = scmp.eq.s32.totalorder %s13, 0
      %p48 = por %p46, %p47
      %p49 = scmp.ne.s32.totalorder %s35, %s36
      %p50 = scmp.eq.s32.totalorder %s14, 1
      %p51 = por %p49, %p50
      %p53 = scmp.ne.s32.totalorder %s36, %s52
      %p54 = scmp.eq.s32.totalorder %s14, 0
      %p55 = por %p53, %p54
      %s56 = sadd.s32 %s15, %s16
      %s57 = sadd.s32 %s27, %s23
      %s58 = ssub.s32 %s56, %s57
      %p59 = scmp.eq.s32.totalorder %s58, 0
      %s61 = sadd.s32 %s60, 1
      %s62 = scalar_select %p59, %s60, %s61
      %p65 = pneg %p59
      %p66 = scmp.eq.s32.totalorder %s8, 1
      %p67 = por %p65, %p66
      %p68 = scmp.ne.s32.totalorder %s60, %s63
      %p69 = scmp.eq.s32.totalorder %s8, 0
      %p70 = por %p68, %p69
      %p71 = scmp.ne.s32.totalorder %s60, %s63
      %p72 = scmp.eq.s32.totalorder %s13, 1
      %p73 = por %p71, %p72
      %p74 = scmp.ne.s32.totalorder %s63, %s64
      %p75 = scmp.eq.s32.totalorder %s13, 0
      %p76 = por %p74, %p75
      %p77 = scmp.ne.s32.totalorder %s63, %s64
      %p78 = scmp.eq.s32.totalorder %s14, 1
      %p79 = por %p77, %p78
      %p81 = scmp.ne.s32.totalorder %s64, %s80
      %p82 = scmp.eq.s32.totalorder %s14, 0
      %p83 = por %p81, %p82
      %s84 = ssub.s32 %s15, %s27
      %p85 = scmp.eq.s32.totalorder %s84, 0
      %s87 = sadd.s32 %s86, 1
      %s88 = scalar_select %p85, %s86, %s87
      %p91 = pneg %p85
      %p92 = scmp.eq.s32.totalorder %s8, 1
      %p93 = por %p91, %p92
      %p94 = scmp.ne.s32.totalorder %s86, %s89
      %p95 = scmp.eq.s32.totalorder %s8, 0
      %p96 = por %p94, %p95
      %p97 = scmp.ne.s32.totalorder %s86, %s89
      %p98 = scmp.eq.s32.totalorder %s13, 1
      %p99 = por %p97, %p98
      %p100 = scmp.ne.s32.totalorder %s89, %s90
      %p101 = scmp.eq.s32.totalorder %s13, 0
      %p102 = por %p100, %p101
      %p103 = scmp.ne.s32.totalorder %s89, %s90
      %p104 = scmp.eq.s32.totalorder %s14, 1
      %p105 = por %p103, %p104
      %p107 = scmp.ne.s32.totalorder %s90, %s106
      %p108 = scmp.eq.s32.totalorder %s14, 0
      %p109 = por %p107, %p108
      %p110 = scmp.le.s32.totalorder 1, %s8
      %p111 = scmp.lt.s32.totalorder %s8, 3
      %p112 = pnand %p110, %p111
      %p113 = pneg %p112
      // Predicated region
      $region9: #{yolo_loss.1} parent=5 // pred_check
        _
      $region10: #{yolo_loss.1} parent=5 // pred_check_branch
        %115 = sbr.rel (%p112) target = $region12
      $region11: #{yolo_loss.1} parent=5 // pred_region
        %s116 = ssub.s32 %s8, 1
      $region12: #{yolo_loss.1} parent=5 // pred_fallthru
        _
      %p117 = scmp.lt.s32.totalorder %s8, 2
      // Predicated region
      $region13: #{yolo_loss.1} parent=5 // pred_check
        %p118 = pneg %p117
      $region14: #{yolo_loss.1} parent=5 // pred_check_branch
        %120 = sbr.rel (%p118) target = $region16
      $region15: #{yolo_loss.1} parent=5 // pred_region
        // Predicated region
        $region17: #{yolo_loss.1} parent=15 // pred_check
          %p121 = pneg %p42
        $region18: #{yolo_loss.1} parent=15 // pred_check_branch
          %123 = sbr.rel (%p121) target = $region20
        $region19: #{yolo_loss.1} parent=15 // pred_region
          %s124 = sand.u32 %s32, 1
          %s125 = sand.u32 %s32, 1
          %s126 = smul.addr %s125, 112
          %s127 = scalar_lea.vmem [#allocation2], %s126
          %s128 = sadd.s32 %s15, %s16
          %s129 = smul.addr %s128, 8
          %s130 = scalar_lea.vmem %s0, %s129
          // Predicated region
          $region21: #{yolo_loss.1} parent=19 // pred_check
            _
          $region22: #{yolo_loss.1} parent=19 // pred_check_branch
            %132 = sbr.rel (0) target = $region24
          $region23: #{yolo_loss.1} parent=19 // pred_region
            // Predicated region
            $region25: #{yolo_loss.1} parent=23 // pred_check
              _
            $region26: #{yolo_loss.1} parent=23 // pred_check_branch
              %134 = sbr.rel (0) target = $region28
            $region27: #{yolo_loss.1} parent=23 // pred_region
              // Predicated region
              $region40: #{yolo_loss.1} parent=27 // pred_check
                _
              $region41: #{yolo_loss.1} parent=27 // pred_check_branch
                %175 = sbr.rel (0) target = $region43
              $region42: #{yolo_loss.1} parent=27 // pred_region
                loop: start=0, step=1, limit=1
                $region44: #{yolo_loss.1} parent=42 // loop_pre_header
                  _
                $region45: #{yolo_loss.1} parent=42 // loop_header
                  %s177 = sphi 0, %s181
                  %p178 = scmp.ge.s32.totalorder %s177, 1
                  %s182 = sphi %s130, %s130
                  %s183 = sphi %s127, %s127
                $region46: #{yolo_loss.1} parent=42 // loop_header_branch
                  %180 = sbr.rel (%p178) target = $region50
                $region47: #{yolo_loss.1} parent=42 // loop_body
                  %v184 = vld [vmem:[%s182] sm:$0xff]
                  %185 = vst [vmem:[%s183] sm:$0xff] %v184
                  %v186 = vld [vmem:[%s182 + $0x10] sm:$0xff]
                  %187 = vst [vmem:[%s183 + $0x8] sm:$0xff] %v186
                  %v188 = vld [vmem:[%s182 + $0x20] sm:$0xff]
                  %189 = vst [vmem:[%s183 + $0x10] sm:$0xff] %v188
                  %v190 = vld [vmem:[%s182 + $0x30] sm:$0xff]
                  %191 = vst [vmem:[%s183 + $0x18] sm:$0xff] %v190
                  %v192 = vld [vmem:[%s182 + $0x40] sm:$0xff]
                  %193 = vst [vmem:[%s183 + $0x20] sm:$0xff] %v192
                  %v194 = vld [vmem:[%s182 + $0x50] sm:$0xff]
                  %195 = vst [vmem:[%s183 + $0x28] sm:$0xff] %v194
                  %v196 = vld [vmem:[%s182 + $0x60] sm:$0xff]
                  %197 = vst [vmem:[%s183 + $0x30] sm:$0xff] %v196
                  %v198 = vld [vmem:[%s182 + $0x70] sm:$0xff]
                  %199 = vst [vmem:[%s183 + $0x38] sm:$0xff] %v198
                  %v200 = vld [vmem:[%s182 + $0x80] sm:$0xff]
                  %201 = vst [vmem:[%s183 + $0x40] sm:$0xff] %v200
                  %v202 = vld [vmem:[%s182 + $0x90] sm:$0xff]
                  %203 = vst [vmem:[%s183 + $0x48] sm:$0xff] %v202
                  %v204 = vld [vmem:[%s182 + $0xa0] sm:$0xff]
                  %205 = vst [vmem:[%s183 + $0x50] sm:$0xff] %v204
                  %v206 = vld [vmem:[%s182 + $0xb0] sm:$0xff]
                  %207 = vst [vmem:[%s183 + $0x58] sm:$0xff] %v206
                  %v208 = vld [vmem:[%s182 + $0xc0] sm:$0xff]
                  %209 = vst [vmem:[%s183 + $0x60] sm:$0xff] %v208
                  %v210 = vld [vmem:[%s182 + $0xd0] sm:$0xff]
                  %211 = vst [vmem:[%s183 + $0x68] sm:$0xff] %v210
                $region48: #{yolo_loss.1} parent=42 // loop_footer
                  %s181 = sadd.s32 1, %s177
                $region49: #{yolo_loss.1} parent=42 // loop_footer_branch
                  %176 = sbr.rel target = $region45
                $region50: #{yolo_loss.1} parent=42 // loop_exit
                  _
              $region43: #{yolo_loss.1} parent=27 // pred_fallthru
                _
              // Predicated region
              $region51: #{yolo_loss.1} parent=27 // pred_check
                _
              $region52: #{yolo_loss.1} parent=27 // pred_check_branch
                %213 = sbr.rel target = $region54
              $region53: #{yolo_loss.1} parent=27 // pred_region
                _
              $region54: #{yolo_loss.1} parent=27 // pred_fallthru
                _
            $region28: #{yolo_loss.1} parent=23 // pred_fallthru
              _
            // Predicated region
            $region29: #{yolo_loss.1} parent=23 // pred_check
              _
            $region30: #{yolo_loss.1} parent=23 // pred_check_branch
              %136 = sbr.rel target = $region32
            $region31: #{yolo_loss.1} parent=23 // pred_region
              loop: start=0, step=1, limit=1
              $region33: #{yolo_loss.1} parent=31 // loop_pre_header
                _
              $region34: #{yolo_loss.1} parent=31 // loop_header
                %s139 = sphi 0, %s143
                %p140 = scmp.ge.s32.totalorder %s139, 1
                %s144 = sphi %s130, %s130
                %s145 = sphi %s127, %s127
              $region35: #{yolo_loss.1} parent=31 // loop_header_branch
                %142 = sbr.rel (%p140) target = $region39
              $region36: #{yolo_loss.1} parent=31 // loop_body
                %v146 = vld [vmem:[%s144] sm:$0xff]
                %147 = vst [vmem:[%s145] sm:$0xff] %v146
                %v148 = vld [vmem:[%s144 + $0x10] sm:$0xff]
                %149 = vst [vmem:[%s145 + $0x8] sm:$0xff] %v148
                %v150 = vld [vmem:[%s144 + $0x20] sm:$0xff]
                %151 = vst [vmem:[%s145 + $0x10] sm:$0xff] %v150
                %v152 = vld [vmem:[%s144 + $0x30] sm:$0xff]
                %153 = vst [vmem:[%s145 + $0x18] sm:$0xff] %v152
                %v154 = vld [vmem:[%s144 + $0x40] sm:$0xff]
                %155 = vst [vmem:[%s145 + $0x20] sm:$0xff] %v154
                %v156 = vld [vmem:[%s144 + $0x50] sm:$0xff]
                %157 = vst [vmem:[%s145 + $0x28] sm:$0xff] %v156
                %v158 = vld [vmem:[%s144 + $0x60] sm:$0xff]
                %159 = vst [vmem:[%s145 + $0x30] sm:$0xff] %v158
                %v160 = vld [vmem:[%s144 + $0x70] sm:$0xff]
                %161 = vst [vmem:[%s145 + $0x38] sm:$0xff] %v160
                %v162 = vld [vmem:[%s144 + $0x80] sm:$0xff]
                %163 = vst [vmem:[%s145 + $0x40] sm:$0xff] %v162
                %v164 = vld [vmem:[%s144 + $0x90] sm:$0xff]
                %165 = vst [vmem:[%s145 + $0x48] sm:$0xff] %v164
                %v166 = vld [vmem:[%s144 + $0xa0] sm:$0xff]
                %167 = vst [vmem:[%s145 + $0x50] sm:$0xff] %v166
                %v168 = vld [vmem:[%s144 + $0xb0] sm:$0xff]
                %169 = vst [vmem:[%s145 + $0x58] sm:$0xff] %v168
                %v170 = vld [vmem:[%s144 + $0xc0] sm:$0xff]
                %171 = vst [vmem:[%s145 + $0x60] sm:$0xff] %v170
                %v172 = vld [vmem:[%s144 + $0xd0] sm:$0xff]
                %173 = vst [vmem:[%s145 + $0x68] sm:$0xff] %v172
              $region37: #{yolo_loss.1} parent=31 // loop_footer
                %s143 = sadd.s32 1, %s139
              $region38: #{yolo_loss.1} parent=31 // loop_footer_branch
                %138 = sbr.rel target = $region34
              $region39: #{yolo_loss.1} parent=31 // loop_exit
                _
            $region32: #{yolo_loss.1} parent=23 // pred_fallthru
              _
          $region24: #{yolo_loss.1} parent=19 // pred_fallthru
            _
          %214 = vnop
        $region20: #{yolo_loss.1} parent=15 // pred_fallthru
          _
        // Predicated region
        $region55: #{yolo_loss.1} parent=15 // pred_check
          %p215 = pneg %p70
        $region56: #{yolo_loss.1} parent=15 // pred_check_branch
          %217 = sbr.rel (%p215) target = $region58
        $region57: #{yolo_loss.1} parent=15 // pred_region
          %s218 = sand.u32 %s60, 1
          %s219 = sand.u32 %s60, 1
          %s220 = smul.addr %s219, 112
          %s221 = scalar_lea.vmem [#allocation3], %s220
          %s222 = sadd.s32 %s15, %s16
          %s223 = smul.addr %s222, 8
          %s224 = scalar_lea.vmem %s1, %s223
          // Predicated region
          $region59: #{yolo_loss.1} parent=57 // pred_check
            _
          $region60: #{yolo_loss.1} parent=57 // pred_check_branch
            %226 = sbr.rel (0) target = $region62
          $region61: #{yolo_loss.1} parent=57 // pred_region
            // Predicated region
            $region63: #{yolo_loss.1} parent=61 // pred_check
              _
            $region64: #{yolo_loss.1} parent=61 // pred_check_branch
              %228 = sbr.rel (0) target = $region66
            $region65: #{yolo_loss.1} parent=61 // pred_region
              // Predicated region
              $region78: #{yolo_loss.1} parent=65 // pred_check
                _
              $region79: #{yolo_loss.1} parent=65 // pred_check_branch
                %269 = sbr.rel (0) target = $region81
              $region80: #{yolo_loss.1} parent=65 // pred_region
                loop: start=0, step=1, limit=1
                $region82: #{yolo_loss.1} parent=80 // loop_pre_header
                  _
                $region83: #{yolo_loss.1} parent=80 // loop_header
                  %s271 = sphi 0, %s275
                  %p272 = scmp.ge.s32.totalorder %s271, 1
                  %s276 = sphi %s224, %s224
                  %s277 = sphi %s221, %s221
                $region84: #{yolo_loss.1} parent=80 // loop_header_branch
                  %274 = sbr.rel (%p272) target = $region88
                $region85: #{yolo_loss.1} parent=80 // loop_body
                  %v278 = vld [vmem:[%s276] sm:$0xff]
                  %279 = vst [vmem:[%s277] sm:$0xff] %v278
                  %v280 = vld [vmem:[%s276 + $0x10] sm:$0xff]
                  %281 = vst [vmem:[%s277 + $0x8] sm:$0xff] %v280
                  %v282 = vld [vmem:[%s276 + $0x20] sm:$0xff]
                  %283 = vst [vmem:[%s277 + $0x10] sm:$0xff] %v282
                  %v284 = vld [vmem:[%s276 + $0x30] sm:$0xff]
                  %285 = vst [vmem:[%s277 + $0x18] sm:$0xff] %v284
                  %v286 = vld [vmem:[%s276 + $0x40] sm:$0xff]
                  %287 = vst [vmem:[%s277 + $0x20] sm:$0xff] %v286
                  %v288 = vld [vmem:[%s276 + $0x50] sm:$0xff]
                  %289 = vst [vmem:[%s277 + $0x28] sm:$0xff] %v288
                  %v290 = vld [vmem:[%s276 + $0x60] sm:$0xff]
                  %291 = vst [vmem:[%s277 + $0x30] sm:$0xff] %v290
                  %v292 = vld [vmem:[%s276 + $0x70] sm:$0xff]
                  %293 = vst [vmem:[%s277 + $0x38] sm:$0xff] %v292
                  %v294 = vld [vmem:[%s276 + $0x80] sm:$0xff]
                  %295 = vst [vmem:[%s277 + $0x40] sm:$0xff] %v294
                  %v296 = vld [vmem:[%s276 + $0x90] sm:$0xff]
                  %297 = vst [vmem:[%s277 + $0x48] sm:$0xff] %v296
                  %v298 = vld [vmem:[%s276 + $0xa0] sm:$0xff]
                  %299 = vst [vmem:[%s277 + $0x50] sm:$0xff] %v298
                  %v300 = vld [vmem:[%s276 + $0xb0] sm:$0xff]
                  %301 = vst [vmem:[%s277 + $0x58] sm:$0xff] %v300
                  %v302 = vld [vmem:[%s276 + $0xc0] sm:$0xff]
                  %303 = vst [vmem:[%s277 + $0x60] sm:$0xff] %v302
                  %v304 = vld [vmem:[%s276 + $0xd0] sm:$0xff]
                  %305 = vst [vmem:[%s277 + $0x68] sm:$0xff] %v304
                $region86: #{yolo_loss.1} parent=80 // loop_footer
                  %s275 = sadd.s32 1, %s271
                $region87: #{yolo_loss.1} parent=80 // loop_footer_branch
                  %270 = sbr.rel target = $region83
                $region88: #{yolo_loss.1} parent=80 // loop_exit
                  _
              $region81: #{yolo_loss.1} parent=65 // pred_fallthru
                _
              // Predicated region
              $region89: #{yolo_loss.1} parent=65 // pred_check
                _
              $region90: #{yolo_loss.1} parent=65 // pred_check_branch
                %307 = sbr.rel target = $region92
              $region91: #{yolo_loss.1} parent=65 // pred_region
                _
              $region92: #{yolo_loss.1} parent=65 // pred_fallthru
                _
            $region66: #{yolo_loss.1} parent=61 // pred_fallthru
              _
            // Predicated region
            $region67: #{yolo_loss.1} parent=61 // pred_check
              _
            $region68: #{yolo_loss.1} parent=61 // pred_check_branch
              %230 = sbr.rel target = $region70
            $region69: #{yolo_loss.1} parent=61 // pred_region
              loop: start=0, step=1, limit=1
              $region71: #{yolo_loss.1} parent=69 // loop_pre_header
                _
              $region72: #{yolo_loss.1} parent=69 // loop_header
                %s233 = sphi 0, %s237
                %p234 = scmp.ge.s32.totalorder %s233, 1
                %s238 = sphi %s224, %s224
                %s239 = sphi %s221, %s221
              $region73: #{yolo_loss.1} parent=69 // loop_header_branch
                %236 = sbr.rel (%p234) target = $region77
              $region74: #{yolo_loss.1} parent=69 // loop_body
                %v240 = vld [vmem:[%s238] sm:$0xff]
                %241 = vst [vmem:[%s239] sm:$0xff] %v240
                %v242 = vld [vmem:[%s238 + $0x10] sm:$0xff]
                %243 = vst [vmem:[%s239 + $0x8] sm:$0xff] %v242
                %v244 = vld [vmem:[%s238 + $0x20] sm:$0xff]
                %245 = vst [vmem:[%s239 + $0x10] sm:$0xff] %v244
                %v246 = vld [vmem:[%s238 + $0x30] sm:$0xff]
                %247 = vst [vmem:[%s239 + $0x18] sm:$0xff] %v246
                %v248 = vld [vmem:[%s238 + $0x40] sm:$0xff]
                %249 = vst [vmem:[%s239 + $0x20] sm:$0xff] %v248
                %v250 = vld [vmem:[%s238 + $0x50] sm:$0xff]
                %251 = vst [vmem:[%s239 + $0x28] sm:$0xff] %v250
                %v252 = vld [vmem:[%s238 + $0x60] sm:$0xff]
                %253 = vst [vmem:[%s239 + $0x30] sm:$0xff] %v252
                %v254 = vld [vmem:[%s238 + $0x70] sm:$0xff]
                %255 = vst [vmem:[%s239 + $0x38] sm:$0xff] %v254
                %v256 = vld [vmem:[%s238 + $0x80] sm:$0xff]
                %257 = vst [vmem:[%s239 + $0x40] sm:$0xff] %v256
                %v258 = vld [vmem:[%s238 + $0x90] sm:$0xff]
                %259 = vst [vmem:[%s239 + $0x48] sm:$0xff] %v258
                %v260 = vld [vmem:[%s238 + $0xa0] sm:$0xff]
                %261 = vst [vmem:[%s239 + $0x50] sm:$0xff] %v260
                %v262 = vld [vmem:[%s238 + $0xb0] sm:$0xff]
                %263 = vst [vmem:[%s239 + $0x58] sm:$0xff] %v262
                %v264 = vld [vmem:[%s238 + $0xc0] sm:$0xff]
                %265 = vst [vmem:[%s239 + $0x60] sm:$0xff] %v264
                %v266 = vld [vmem:[%s238 + $0xd0] sm:$0xff]
                %267 = vst [vmem:[%s239 + $0x68] sm:$0xff] %v266
              $region75: #{yolo_loss.1} parent=69 // loop_footer
                %s237 = sadd.s32 1, %s233
              $region76: #{yolo_loss.1} parent=69 // loop_footer_branch
                %232 = sbr.rel target = $region72
              $region77: #{yolo_loss.1} parent=69 // loop_exit
                _
            $region70: #{yolo_loss.1} parent=61 // pred_fallthru
              _
          $region62: #{yolo_loss.1} parent=57 // pred_fallthru
            _
          %308 = vnop
        $region58: #{yolo_loss.1} parent=15 // pred_fallthru
          _
      $region16: #{yolo_loss.1} parent=5 // pred_fallthru
        _
      %p309 = scmp.le.s32.totalorder 1, %s8
      %p310 = scmp.lt.s32.totalorder %s8, 3
      %p311 = pnand %p309, %p310
      %p312 = pneg %p311
      // Predicated region
      $region93: #{yolo_loss.1} parent=5 // pred_check
        _
      $region94: #{yolo_loss.1} parent=5 // pred_check_branch
        %314 = sbr.rel (%p311) target = $region96
      $region95: #{yolo_loss.1} parent=5 // pred_region
        %s315 = ssub.s32 %s8, 1
        %s316 = sand.u32 %s35, 1
        %s317 = sand.u32 %s35, 1
        %s318 = smul.addr %s317, 112
        %s319 = scalar_lea.vmem [#allocation2], %s318
        // Predicated region
        $region97: #{yolo_loss.1} parent=95 // pred_check
          %p320 = pneg %p48
        $region98: #{yolo_loss.1} parent=95 // pred_check_branch
          %322 = sbr.rel (%p320) target = $region100
        $region99: #{yolo_loss.1} parent=95 // pred_region
          _
        $region100: #{yolo_loss.1} parent=95 // pred_fallthru
          _
        %s323 = sand.u32 %s63, 1
        %s324 = sand.u32 %s63, 1
        %s325 = smul.addr %s324, 112
        %s326 = scalar_lea.vmem [#allocation3], %s325
        // Predicated region
        $region101: #{yolo_loss.1} parent=95 // pred_check
          %p327 = pneg %p76
        $region102: #{yolo_loss.1} parent=95 // pred_check_branch
          %329 = sbr.rel (%p327) target = $region104
        $region103: #{yolo_loss.1} parent=95 // pred_region
          _
        $region104: #{yolo_loss.1} parent=95 // pred_fallthru
          _
        %s330 = sand.u32 %s35, 1
        %s331 = sand.u32 %s35, 1
        %s332 = smul.addr %s331, 112
        %s333 = scalar_lea.vmem [#allocation2], %s332
        %p334 = pneg %p48
        %p335 = pneg %p45
        %s336 = sand.u32 %s63, 1
        %s337 = sand.u32 %s63, 1
        %s338 = smul.addr %s337, 112
        %s339 = scalar_lea.vmem [#allocation3], %s338
        %p340 = pneg %p76
        %p341 = pneg %p73
        %p342 = pneg %p102
        %p343 = pneg %p99
        %p344 = scmp.lt.s32.totalorder %s17, 1
        %s345 = scalar_select %p344, %s17, 1
        %s346 = smul.addr %s345, 8
        %s347 = scalar_lea.vmem %s2, %s346
        %s348 = sadd.s32 %s17, %s18
        %s349 = sadd.s32 %s17, %s18
        %p350 = scmp.lt.s32.totalorder %s17, 1
        %s351 = scalar_select %p350, %s17, 1
        %s352 = smul.addr %s351, 8
        %s353 = scalar_lea.vmem %s2, %s352
        %p354 = scmp.eq.s32.totalorder %s18, 0
        // Predicated region
        $region105: #{yolo_loss.1} parent=95 // pred_check
          %p355 = pneg %p354
        $region106: #{yolo_loss.1} parent=95 // pred_check_branch
          %357 = sbr.rel (%p355) target = $region108
        $region107: #{yolo_loss.1} parent=95 // pred_region
          %358 = vst [vmem:[%s353] sm:$0xff] 0.0
        $region108: #{yolo_loss.1} parent=95 // pred_fallthru
          _
        %s359 = sadd.s32 0, 32
        %s360 = scalar_lea.vmem %s326, %s359 [#allocation3]
        %v361 = vld [vmem:[%s360] sm:$0xff]
        %vm362 = vcmp.gt.f32.partialorder %v361, 0.0
        %v363 = vld [vmem:[%s319] sm:$0xff]
        %v364 = vld [vmem:[%s326] sm:$0xff]
        %v365 = vsub.f32 %v363, %v364
        %v366 = vmul.f32 %v365, %v365
        %s367 = sadd.s32 0, 8
        %s368 = scalar_lea.vmem %s319, %s367 [#allocation2]
        %v369 = vld [vmem:[%s368] sm:$0xff]
        %s370 = scalar_lea.vmem %s326, %s367 [#allocation3]
        %v371 = vld [vmem:[%s370] sm:$0xff]
        %v372 = vsub.f32 %v369, %v371
        %v373 = vmul.f32 %v372, %v372
        %s374 = sadd.s32 0, 16
        %s375 = scalar_lea.vmem %s319, %s374 [#allocation2]
        %v376 = vld [vmem:[%s375] sm:$0xff]
        %s377 = scalar_lea.vmem %s326, %s374 [#allocation3]
        %v378 = vld [vmem:[%s377] sm:$0xff]
        %v379 = vsub.f32 %v376, %v378
        %v380 = vmul.f32 %v379, %v379
        %s381 = sadd.s32 0, 24
        %s382 = scalar_lea.vmem %s319, %s381 [#allocation2]
        %v383 = vld [vmem:[%s382] sm:$0xff]
        %s384 = scalar_lea.vmem %s326, %s381 [#allocation3]
        %v385 = vld [vmem:[%s384] sm:$0xff]
        %v386 = vsub.f32 %v383, %v385
        %v387 = vmul.f32 %v386, %v386
        %v388 = vadd.f32 %v366, %v373
        %v389 = vadd.f32 %v380, %v387
        %v390 = vadd.f32 %v388, %v389
        %s391 = sadd.s32 0, 40
        %s392 = scalar_lea.vmem %s326, %s391 [#allocation3]
        %v393 = vld [vmem:[%s392] sm:$0xff]
        %s394 = sadd.s32 0, 48
        %s395 = scalar_lea.vmem %s326, %s394 [#allocation3]
        %v396 = vld [vmem:[%s395] sm:$0xff]
        %s397 = sadd.s32 0, 56
        %s398 = scalar_lea.vmem %s326, %s397 [#allocation3]
        %v399 = vld [vmem:[%s398] sm:$0xff]
        %s400 = sadd.s32 0, 64
        %s401 = scalar_lea.vmem %s326, %s400 [#allocation3]
        %v402 = vld [vmem:[%s401] sm:$0xff]
        %v403 = vmul.f32 %v393, 0.25
        %v404 = vmul.f32 %v399, 0.5
        %v405 = vsub.f32 %v403, %v404
        %v406 = vadd.f32 %v403, %v404
        %v407 = vmul.f32 %v396, 0.25
        %v408 = vmul.f32 %v402, 0.5
        %v409 = vsub.f32 %v407, %v408
        %v410 = vadd.f32 %v407, %v408
        %v411 = vsub.f32 %v406, %v405
        %v412 = vsub.f32 %v410, %v409
        %v413 = vmul.f32 %v411, %v412
        %s414 = scalar_lea.vmem %s319, %s359 [#allocation2]
        %v415 = vld [vmem:[%s414] sm:$0xff]
        %v416 = vsub.f32 %v415, %v361
        %v417 = vmul.f32 %v416, %v416
        %s418 = scalar_lea.vmem %s319, %s391 [#allocation2]
        %v419 = vld [vmem:[%s418] sm:$0xff]
        %s420 = scalar_lea.vmem %s319, %s394 [#allocation2]
        %v421 = vld [vmem:[%s420] sm:$0xff]
        %s422 = scalar_lea.vmem %s319, %s397 [#allocation2]
        %v423 = vld [vmem:[%s422] sm:$0xff]
        %s424 = scalar_lea.vmem %s319, %s400 [#allocation2]
        %v425 = vld [vmem:[%s424] sm:$0xff]
        %v426 = vmul.f32 %v419, 0.25
        %v427 = vmul.f32 %v423, 0.5
        %v428 = vsub.f32 %v426, %v427
        %v429 = vadd.f32 %v426, %v427
        %v430 = vmul.f32 %v421, 0.25
        %v431 = vmul.f32 %v425, 0.5
        %v432 = vsub.f32 %v430, %v431
        %v433 = vadd.f32 %v430, %v431
        %v434 = vmin.f32 %v429, %v406
        %v435 = vmax.f32 %v428, %v405
        %v436 = vsub.f32 %v434, %v435
        %v437 = vmax.f32 %v436, 0.0
        %v438 = vmin.f32 %v433, %v410
        %v439 = vmax.f32 %v432, %v409
        %v440 = vsub.f32 %v438, %v439
        %v441 = vmax.f32 %v440, 0.0
        %v442 = vmul.f32 %v437, %v441
        %v443 = vsub.f32 %v429, %v428
        %v444 = vsub.f32 %v433, %v432
        %v445 = vmul.f32 %v443, %v444
        %v446 = vadd.f32 %v445, %v413
        %v447 = vsub.f32 %v446, %v442
        %vm448 = vcmp.gt.f32.partialorder %v447, 0.0
        %v449 = vsel %vm448, %v447, 1.0
        %v450 = vrcp.pop %v449
        %v451 = vmul.f32 %v442, %v450
        %s452 = sadd.s32 0, 72
        %s453 = scalar_lea.vmem %s319, %s452 [#allocation2]
        %v454 = vld [vmem:[%s453] sm:$0xff]
        %s455 = scalar_lea.vmem %s326, %s452 [#allocation3]
        %v456 = vld [vmem:[%s455] sm:$0xff]
        %v457 = vsub.f32 %v454, %v456
        %v458 = vmul.f32 %v457, %v457
        %s459 = sadd.s32 0, 80
        %s460 = scalar_lea.vmem %s319, %s459 [#allocation2]
        %v461 = vld [vmem:[%s460] sm:$0xff]
        %s462 = sadd.s32 0, 88
        %s463 = scalar_lea.vmem %s319, %s462 [#allocation2]
        %v464 = vld [vmem:[%s463] sm:$0xff]
        %s465 = sadd.s32 0, 96
        %s466 = scalar_lea.vmem %s319, %s465 [#allocation2]
        %v467 = vld [vmem:[%s466] sm:$0xff]
        %s468 = sadd.s32 0, 104
        %s469 = scalar_lea.vmem %s319, %s468 [#allocation2]
        %v470 = vld [vmem:[%s469] sm:$0xff]
        %v471 = vmul.f32 %v461, 0.25
        %v472 = vmul.f32 %v467, 0.5
        %v473 = vsub.f32 %v471, %v472
        %v474 = vadd.f32 %v471, %v472
        %v475 = vmul.f32 %v464, 0.25
        %v476 = vmul.f32 %v470, 0.5
        %v477 = vsub.f32 %v475, %v476
        %v478 = vadd.f32 %v475, %v476
        %v479 = vmin.f32 %v474, %v406
        %v480 = vmax.f32 %v473, %v405
        %v481 = vsub.f32 %v479, %v480
        %v482 = vmax.f32 %v481, 0.0
        %v483 = vmin.f32 %v478, %v410
        %v484 = vmax.f32 %v477, %v409
        %v485 = vsub.f32 %v483, %v484
        %v486 = vmax.f32 %v485, 0.0
        %v487 = vmul.f32 %v482, %v486
        %v488 = vsub.f32 %v474, %v473
        %v489 = vsub.f32 %v478, %v477
        %v490 = vmul.f32 %v488, %v489
        %v491 = vadd.f32 %v490, %v413
        %v492 = vsub.f32 %v491, %v487
        %vm493 = vcmp.gt.f32.partialorder %v492, 0.0
        %v494 = vsel %vm493, %v492, 1.0
        %v495 = vrcp.pop %v494
        %v496 = vmul.f32 %v487, %v495
        %s497 = scalar_lea.vmem %s326, %s459 [#allocation3]
        %v498 = vld [vmem:[%s497] sm:$0xff]
        %s499 = scalar_lea.vmem %s326, %s462 [#allocation3]
        %v500 = vld [vmem:[%s499] sm:$0xff]
        %s501 = scalar_lea.vmem %s326, %s465 [#allocation3]
        %v502 = vld [vmem:[%s501] sm:$0xff]
        %s503 = scalar_lea.vmem %s326, %s468 [#allocation3]
        %v504 = vld [vmem:[%s503] sm:$0xff]
        %vm505 = vcmp.gt.f32.partialorder %v496, %v451
        %v506 = vsel %vm505, %v454, %v415
        %v507 = vsel %vm505, %v461, %v419
        %v508 = vsel %vm505, %v464, %v421
        %v509 = vsel %vm505, %v467, %v423
        %v510 = vsel %vm505, %v470, %v425
        %v511 = vsel %vm505, %v456, %v361
        %v512 = vsel %vm505, %v498, %v393
        %v513 = vsel %vm505, %v500, %v396
        %v514 = vsel %vm505, %v502, %v399
        %v515 = vsel %vm505, %v504, %v402
        %v516 = vsub.f32 %v507, %v512
        %v517 = vmul.f32 %v516, %v516
        %v518 = vsub.f32 %v508, %v513
        %v519 = vmul.f32 %v518, %v518
        %v520 = vadd.f32 %v517, %v519
        %v521 = vrsqrt.pop %v509
        %v522 = vmul.f32 %v509, %v521
        %vm523 = vcmp.eq.f32.partialorder %v509, inf
        %v524 = vsel %vm523, %v509, %v522
        %vm525 = vcmp.eq.f32.partialorder %v509, 0.0
        %v526 = vand.u32 %v509, 2147483648
        %v527 = vsel %vm525, %v526, %v524
        %v528 = vrsqrt.pop %v514
        %v529 = vmul.f32 %v514, %v528
        %vm530 = vcmp.eq.f32.partialorder %v514, inf
        %v531 = vsel %vm530, %v514, %v529
        %vm532 = vcmp.eq.f32.partialorder %v514, 0.0
        %v533 = vand.u32 %v514, 2147483648
        %v534 = vsel %vm532, %v533, %v531
        %v535 = vsub.f32 %v527, %v534
        %v536 = vmul.f32 %v535, %v535
        %v537 = vrsqrt.pop %v510
        %v538 = vmul.f32 %v510, %v537
        %vm539 = vcmp.eq.f32.partialorder %v510, inf
        %v540 = vsel %vm539, %v510, %v538
        %vm541 = vcmp.eq.f32.partialorder %v510, 0.0
        %v542 = vand.u32 %v510, 2147483648
        %v543 = vsel %vm541, %v542, %v540
        %v544 = vrsqrt.pop %v515
        %v545 = vmul.f32 %v515, %v544
        %vm546 = vcmp.eq.f32.partialorder %v515, inf
        %v547 = vsel %vm546, %v515, %v545
        %vm548 = vcmp.eq.f32.partialorder %v515, 0.0
        %v549 = vand.u32 %v515, 2147483648
        %v550 = vsel %vm548, %v549, %v547
        %v551 = vsub.f32 %v543, %v550
        %v552 = vmul.f32 %v551, %v551
        %v553 = vadd.f32 %v536, %v552
        %v554 = vsub.f32 %v506, %v511
        %v555 = vmul.f32 %v554, %v554
        %v556 = vadd.f32 %v417, %v458
        %v557 = vadd.f32 %v520, %v553
        %v558 = vmul.f32 %v557, 5.0
        %v559 = vadd.f32 %v558, %v555
        %v560 = vadd.f32 %v559, %v390
        %v561 = vmul.f32 %v556, 0.5
        %v562 = vsel %vm362, %v560, %v561
        %v563 = vadd.f32 %v562, 0.0
        %v564 = vld [vmem:[%s353] sm:$0xff]
        %v565 = vadd.f32 %v564, %v563
        %566 = vst [vmem:[%s353] sm:$0xff] %v565
        %p567 = scmp.lt.s32.totalorder %s17, 1
        %s568 = scalar_select %p567, %s17, 1
        %s569 = smul.addr %s568, 8
        %s570 = scalar_lea.vmem %s2, %s569
        // Predicated region
        $region109: #{yolo_loss.1} parent=95 // pred_check
          %p571 = pneg %p99
        $region110: #{yolo_loss.1} parent=95 // pred_check_branch
          %573 = sbr.rel (%p571) target = $region112
        $region111: #{yolo_loss.1} parent=95 // pred_region
          _
        $region112: #{yolo_loss.1} parent=95 // pred_fallthru
          _
      $region96: #{yolo_loss.1} parent=5 // pred_fallthru
        _
      %p574 = scmp.le.s32.totalorder 2, %s8
      // Predicated region
      $region113: #{yolo_loss.1} parent=5 // pred_check
        %p575 = pneg %p574
      $region114: #{yolo_loss.1} parent=5 // pred_check_branch
        %577 = sbr.rel (%p575) target = $region116
      $region115: #{yolo_loss.1} parent=5 // pred_region
        %s578 = ssub.s32 %s8, 2
        // Predicated region
        $region117: #{yolo_loss.1} parent=115 // pred_check
          %p579 = pneg %p105
        $region118: #{yolo_loss.1} parent=115 // pred_check_branch
          %581 = sbr.rel (%p579) target = $region120
        $region119: #{yolo_loss.1} parent=115 // pred_region
          %p582 = scmp.lt.s32.totalorder %s19, 1
          %s583 = scalar_select %p582, %s19, 1
          %s584 = smul.addr %s583, 8
          %s585 = scalar_lea.vmem %s2, %s584
        $region120: #{yolo_loss.1} parent=115 // pred_fallthru
          _
      $region116: #{yolo_loss.1} parent=5 // pred_fallthru
        _
    $region6: #{yolo_loss.1} parent=1 // loop_footer
      %s12 = sadd.s32 1, %s8
    $region7: #{yolo_loss.1} parent=1 // loop_footer_branch
      %7 = sbr.rel target = $region3
    $region8: #{yolo_loss.1} parent=1 // loop_exit
      _

</llo_original>
